<compile_context>
chip_gen: v6e
topology: v6e:2x2x1
jax: 0.10.0
libtpu: 0.0.40
codegen_flags: <defaults>
</compile_context>

<pallas_src>
import jax
import jax.numpy as jnp
from jax.experimental import pallas as pl
from jax.experimental.pallas import tpu as pltpu

INPUT_SIZE = 21 * 3          # 63
NUM_CLASSES = 26             # len([chr(i) for i in range(65, 91)])
H1 = 256
H2 = 128
MAX_TILE_B = 4096


def _round_up(n, m):
    return ((n + m - 1) // m) * m


def _mlp_kernel(x_ref, w1_ref, b1_ref, w2_ref, b2_ref, w3_ref, b3_ref, o_ref):
    # x arrives as f32 straight from HBM; bf16 cast happens in-kernel so the
    # wrapper never does a separate pad/cast pass over the input.
    x = x_ref[...].astype(jnp.bfloat16)                               # (tb, 63)

    # fc1 + ReLU   (Dropout(0.3) is identity in eval/inference)
    h1 = jnp.dot(x, w1_ref[...], preferred_element_type=jnp.float32) + b1_ref[...]
    h1 = jnp.maximum(h1, 0.0).astype(jnp.bfloat16)                    # cast only for next MXU op

    # fc2 + ReLU   (Dropout(0.3) is identity in eval/inference)
    h2 = jnp.dot(h1, w2_ref[...], preferred_element_type=jnp.float32) + b2_ref[...]
    h2 = jnp.maximum(h2, 0.0).astype(jnp.bfloat16)

    # fc3: 26 logits (full last dim of the output block — no padding, no slab)
    logits = jnp.dot(h2, w3_ref[...], preferred_element_type=jnp.float32) + b3_ref[...]
    o_ref[...] = logits.astype(o_ref.dtype)


def _choose_tile_b(B):
    """Batch tile: big enough to amortize per-step overhead, >=2 grid steps for
    large B so v7x can shard the parallel batch axis across its 2 TensorCores."""
    if B <= MAX_TILE_B:
        return min(MAX_TILE_B, _round_up(max(B, 8), 8))
    return min(MAX_TILE_B, _round_up(-(-B // 2), 256))


def prepare_params(params):
    """One-time parameter conversion, hoisted out of the per-call jitted path."""
    w1, b1, w2, b2, w3, b3 = params
    return (w1.astype(jnp.bfloat16),
            b1.reshape(1, H1).astype(jnp.float32),
            w2.astype(jnp.bfloat16),
            b2.reshape(1, H2).astype(jnp.float32),
            w3.astype(jnp.bfloat16),
            b3.reshape(1, NUM_CLASSES).astype(jnp.float32))


@jax.jit
def asl_landmark_forward(x, prepared_params):
    """x: (B, 63) float32 -> logits (B, 26) float32."""
    w1, b1, w2, b2, w3, b3 = prepared_params
    B = x.shape[0]

    tile_b = _choose_tile_b(B)
    grid = (pl.cdiv(B, tile_b),)          # ragged last block handled by Pallas masking

    const = lambda i: (0, 0)              # weights/biases stay resident in VMEM
    in_specs = [
        pl.BlockSpec((tile_b, INPUT_SIZE), lambda i: (i, 0)),   # x tile (f32, cast in-kernel)
        pl.BlockSpec((INPUT_SIZE, H1), const),
        pl.BlockSpec((1, H1), const),
        pl.BlockSpec((H1, H2), const),
        pl.BlockSpec((1, H2), const),
        pl.BlockSpec((H2, NUM_CLASSES), const),
        pl.BlockSpec((1, NUM_CLASSES), const),
    ]
    out_specs = pl.BlockSpec((tile_b, NUM_CLASSES), lambda i: (i, 0))

    flops = 2 * B * (INPUT_SIZE * H1 + H1 * H2 + H2 * NUM_CLASSES)
    bytes_accessed = (
        B * INPUT_SIZE * 4                                        # x (f32)
        + B * NUM_CLASSES * 4                                     # logits (f32)
        + (INPUT_SIZE * H1 + H1 * H2 + H2 * NUM_CLASSES) * 2      # weights (bf16)
        + (H1 + H2 + NUM_CLASSES) * 4                             # biases (f32)
    )

    return pl.pallas_call(
        _mlp_kernel,
        out_shape=jax.ShapeDtypeStruct((B, NUM_CLASSES), jnp.float32),
        grid=grid,
        in_specs=in_specs,
        out_specs=out_specs,
        compiler_params=pltpu.CompilerParams(
            dimension_semantics=("parallel",),
            vmem_limit_bytes=48 * 1024 * 1024),
        cost_estimate=pl.CostEstimate(
            flops=flops, transcendentals=0, bytes_accessed=bytes_accessed),
    )(x, w1, b1, w2, b2, w3, b3)


def init_params(key):
    """Deterministic synthetic parameters (PyTorch nn.Linear shapes, transposed)."""
    k1, k2, k3, k4, k5, k6 = jax.random.split(key, 6)
    w1 = jax.random.normal(k1, (INPUT_SIZE, H1), jnp.float32) * 0.05
    b1 = jax.random.normal(k2, (1, H1), jnp.float32) * 0.01
    w2 = jax.random.normal(k3, (H1, H2), jnp.float32) * 0.05
    b2 = jax.random.normal(k4, (1, H2), jnp.float32) * 0.01
    w3 = jax.random.normal(k5, (H2, NUM_CLASSES), jnp.float32) * 0.05
    b3 = jax.random.normal(k6, (1, NUM_CLASSES), jnp.float32) * 0.01
    return (w1, b1, w2, b2, w3, b3)


def reference_forward(x, params):
    """Pure-JAX reference using the same bf16-operand / f32-accumulate recipe."""
    w1, b1, w2, b2, w3, b3 = params
    xb = x.astype(jnp.bfloat16)
    h1 = jnp.dot(xb, w1.astype(jnp.bfloat16),
                 preferred_element_type=jnp.float32) + b1
    h1 = jnp.maximum(h1, 0.0).astype(jnp.bfloat16)
    h2 = jnp.dot(h1, w2.astype(jnp.bfloat16),
                 preferred_element_type=jnp.float32) + b2
    h2 = jnp.maximum(h2, 0.0).astype(jnp.bfloat16)
    return jnp.dot(h2, w3.astype(jnp.bfloat16),
                   preferred_element_type=jnp.float32) + b3


if __name__ == "__main__":
    key = jax.random.PRNGKey(0)
    kx, kx2, kp = jax.random.split(key, 3)
    raw_params = init_params(kp)
    params = prepare_params(raw_params)     # one-time bf16 conversion, outside jit

    # Small aligned batch.
    B = 8
    x = jax.random.normal(kx, (B, INPUT_SIZE), jnp.float32)
    out = jax.block_until_ready(asl_landmark_forward(x, params))
    ref = reference_forward(x, raw_params)
    assert out.shape == (B, NUM_CLASSES)
    assert jnp.allclose(out, ref, atol=1e-2, rtol=1e-2)

    # Batch not divisible by 8 (exercises the ragged-last-block path).
    B2 = 37
    x2 = jax.random.normal(kx2, (B2, INPUT_SIZE), jnp.float32)
    out2 = jax.block_until_ready(asl_landmark_forward(x2, params))
    ref2 = reference_forward(x2, raw_params)
    assert out2.shape == (B2, NUM_CLASSES)
    assert jnp.allclose(out2, ref2, atol=1e-2, rtol=1e-2)

    print("KERNEL_OK")
</pallas_src>

<mosaic_0001>
module attributes {stable_mosaic.version = 11 : i64} {
  func.func @_mlp_kernel(%arg0: i32, %arg1: memref<8x63xf32, #tpu.memory_space<vmem>>, %arg2: memref<63x256xbf16, #tpu.memory_space<vmem>>, %arg3: memref<1x256xf32, #tpu.memory_space<vmem>>, %arg4: memref<256x128xbf16, #tpu.memory_space<vmem>>, %arg5: memref<1x128xf32, #tpu.memory_space<vmem>>, %arg6: memref<128x26xbf16, #tpu.memory_space<vmem>>, %arg7: memref<1x26xf32, #tpu.memory_space<vmem>>, %arg8: memref<8x26xf32, #tpu.memory_space<vmem>>) attributes {dimension_semantics = [#tpu.dimension_semantics<parallel>], iteration_bounds = array<i64: 1>, scalar_prefetch = 0 : i64, scratch_operands = 0 : i64, tpu.core_type = #tpu.core_type<tc>, window_params = [{transform_indices = @transform_0, window_bounds = array<i64: 8, 63>}, {pipeline_mode = #tpu.pipeline_mode<synchronous>, transform_indices = @transform_1, window_bounds = array<i64: 63, 256>}, {pipeline_mode = #tpu.pipeline_mode<synchronous>, transform_indices = @transform_2, window_bounds = array<i64: 1, 256>}, {pipeline_mode = #tpu.pipeline_mode<synchronous>, transform_indices = @transform_3, window_bounds = array<i64: 256, 128>}, {pipeline_mode = #tpu.pipeline_mode<synchronous>, transform_indices = @transform_4, window_bounds = array<i64: 1, 128>}, {pipeline_mode = #tpu.pipeline_mode<synchronous>, transform_indices = @transform_5, window_bounds = array<i64: 128, 26>}, {pipeline_mode = #tpu.pipeline_mode<synchronous>, transform_indices = @transform_6, window_bounds = array<i64: 1, 26>}, {transform_indices = @transform_7, window_bounds = array<i64: 8, 26>}]} {
    %c0 = arith.constant 0 : index
    %c0_0 = arith.constant 0 : index
    %0 = vector.load %arg1[%c0, %c0_0] : memref<8x63xf32, #tpu.memory_space<vmem>>, vector<8x63xf32>
    %1 = arith.truncf %0 : vector<8x63xf32> to vector<8x63xbf16>
    %c0_1 = arith.constant 0 : index
    %c0_2 = arith.constant 0 : index
    %2 = vector.load %arg2[%c0_1, %c0_2] : memref<63x256xbf16, #tpu.memory_space<vmem>>, vector<63x256xbf16>
    %cst = arith.constant dense<0.000000e+00> : vector<8x256xf32>
    %3 = tpu.matmul %1, %2, %cst {dimension_numbers = #tpu.dot_dimension_numbers<[1], [0], [0], [1], [0, 0, 1, 1], [], []>} : vector<8x63xbf16>, vector<63x256xbf16>, vector<8x256xf32> -> vector<8x256xf32>
    %c0_3 = arith.constant 0 : index
    %c0_4 = arith.constant 0 : index
    %4 = vector.load %arg3[%c0_3, %c0_4] : memref<1x256xf32, #tpu.memory_space<vmem>>, vector<1x256xf32>
    %5 = vector.broadcast %4 : vector<1x256xf32> to vector<8x256xf32>
    %6 = arith.addf %3, %5 : vector<8x256xf32>
    %cst_5 = arith.constant 0.000000e+00 : f32
    %7 = vector.broadcast %cst_5 : f32 to vector<8x256xf32>
    %8 = arith.maximumf %6, %7 : vector<8x256xf32>
    %9 = arith.truncf %8 : vector<8x256xf32> to vector<8x256xbf16>
    %c0_6 = arith.constant 0 : index
    %c0_7 = arith.constant 0 : index
    %10 = vector.load %arg4[%c0_6, %c0_7] : memref<256x128xbf16, #tpu.memory_space<vmem>>, vector<256x128xbf16>
    %cst_8 = arith.constant dense<0.000000e+00> : vector<8x128xf32>
    %11 = tpu.matmul %9, %10, %cst_8 {dimension_numbers = #tpu.dot_dimension_numbers<[1], [0], [0], [1], [0, 0, 1, 1], [], []>} : vector<8x256xbf16>, vector<256x128xbf16>, vector<8x128xf32> -> vector<8x128xf32>
    %c0_9 = arith.constant 0 : index
    %c0_10 = arith.constant 0 : index
    %12 = vector.load %arg5[%c0_9, %c0_10] : memref<1x128xf32, #tpu.memory_space<vmem>>, vector<1x128xf32>
    %13 = vector.broadcast %12 : vector<1x128xf32> to vector<8x128xf32>
    %14 = arith.addf %11, %13 : vector<8x128xf32>
    %cst_11 = arith.constant 0.000000e+00 : f32
    %15 = vector.broadcast %cst_11 : f32 to vector<8x128xf32>
    %16 = arith.maximumf %14, %15 : vector<8x128xf32>
    %17 = arith.truncf %16 : vector<8x128xf32> to vector<8x128xbf16>
    %c0_12 = arith.constant 0 : index
    %c0_13 = arith.constant 0 : index
    %18 = vector.load %arg6[%c0_12, %c0_13] : memref<128x26xbf16, #tpu.memory_space<vmem>>, vector<128x26xbf16>
    %cst_14 = arith.constant dense<0.000000e+00> : vector<8x26xf32>
    %19 = tpu.matmul %17, %18, %cst_14 {dimension_numbers = #tpu.dot_dimension_numbers<[1], [0], [0], [1], [0, 0, 1, 1], [], []>} : vector<8x128xbf16>, vector<128x26xbf16>, vector<8x26xf32> -> vector<8x26xf32>
    %c0_15 = arith.constant 0 : index
    %c0_16 = arith.constant 0 : index
    %20 = vector.load %arg7[%c0_15, %c0_16] : memref<1x26xf32, #tpu.memory_space<vmem>>, vector<1x26xf32>
    %21 = vector.broadcast %20 : vector<1x26xf32> to vector<8x26xf32>
    %22 = arith.addf %19, %21 : vector<8x26xf32>
    %c0_17 = arith.constant 0 : index
    %c0_18 = arith.constant 0 : index
    %23 = vector.load %arg8[%c0_17, %c0_18] : memref<8x26xf32, #tpu.memory_space<vmem>>, vector<8x26xf32>
    tpu.vector_store %arg8[%c0_17, %c0_18], %22 {strides = array<i32>} : memref<8x26xf32, #tpu.memory_space<vmem>>, vector<8x26xf32>,
    return
  }
  func.func @transform_0(%arg0: i32) -> (i32, i32) {
    %c0_i32 = arith.constant 0 : i32
    %c0_i32_0 = arith.constant 0 : i32
    return %arg0, %c0_i32 : i32, i32
  }
  func.func @transform_1(%arg0: i32) -> (i32, i32) {
    %c0_i32 = arith.constant 0 : i32
    %c0_i32_0 = arith.constant 0 : i32
    %c0_i32_1 = arith.constant 0 : i32
    return %c0_i32, %c0_i32_0 : i32, i32
  }
  func.func @transform_2(%arg0: i32) -> (i32, i32) {
    %c0_i32 = arith.constant 0 : i32
    %c0_i32_0 = arith.constant 0 : i32
    %c0_i32_1 = arith.constant 0 : i32
    return %c0_i32, %c0_i32_0 : i32, i32
  }
  func.func @transform_3(%arg0: i32) -> (i32, i32) {
    %c0_i32 = arith.constant 0 : i32
    %c0_i32_0 = arith.constant 0 : i32
    %c0_i32_1 = arith.constant 0 : i32
    return %c0_i32, %c0_i32_0 : i32, i32
  }
  func.func @transform_4(%arg0: i32) -> (i32, i32) {
    %c0_i32 = arith.constant 0 : i32
    %c0_i32_0 = arith.constant 0 : i32
    %c0_i32_1 = arith.constant 0 : i32
    return %c0_i32, %c0_i32_0 : i32, i32
  }
  func.func @transform_5(%arg0: i32) -> (i32, i32) {
    %c0_i32 = arith.constant 0 : i32
    %c0_i32_0 = arith.constant 0 : i32
    %c0_i32_1 = arith.constant 0 : i32
    return %c0_i32, %c0_i32_0 : i32, i32
  }
  func.func @transform_6(%arg0: i32) -> (i32, i32) {
    %c0_i32 = arith.constant 0 : i32
    %c0_i32_0 = arith.constant 0 : i32
    %c0_i32_1 = arith.constant 0 : i32
    return %c0_i32, %c0_i32_0 : i32, i32
  }
  func.func @transform_7(%arg0: i32) -> (i32, i32) {
    %c0_i32 = arith.constant 0 : i32
    %c0_i32_0 = arith.constant 0 : i32
    return %arg0, %c0_i32 : i32, i32
  }
}

</mosaic_0001>

<llo_original>
// kernel: asl_landmark_forward.1
$region0: #{asl_landmark_forward.1}
  #allocation0 [shape = 'u32[]', space=smem, size = 0x4, offset = 0x4, fixed_abs, tag = 'smem constant byte address 0x4 - core index']
  #allocation1 [shape = 'u32[144,128]{1,0:T(1,128)}', space=vmem, size = 0x12000, scoped, tag = 'internal scratch']
  %s0 = inlined_call_operand.vmem [shape: f32[8,63], index: 0, kind: input, shape index: {}]
  %s1 = inlined_call_operand.vmem [shape: bf16[63,256], index: 1, kind: input, shape index: {}]
  %s2 = inlined_call_operand.vmem [shape: f32[1,256], index: 2, kind: input, shape index: {}]
  %s3 = inlined_call_operand.hbm [shape: bf16[256,128], index: 3, kind: input, shape index: {}]
  %s4 = inlined_call_operand.vmem [shape: f32[1,128], index: 4, kind: input, shape index: {}]
  %s5 = inlined_call_operand.vmem [shape: bf16[128,26], index: 5, kind: input, shape index: {}]
  %s6 = inlined_call_operand.vmem [shape: f32[1,26], index: 6, kind: input, shape index: {}]
  %s7 = inlined_call_operand.hbm [shape: f32[8,26], index: 7, kind: output, shape index: {}]
  %s8 = sld [smem:[#allocation0]]
  $region42: #{asl_landmark_forward.1} parent=0
    _
  %s10 = ssub.s32 1, %s8
  %s11 = scalar_select 0, %s10, %s8
  $region1: #{asl_landmark_forward.1} parent=0
    #allocation2 [shape = 'u8[65536]{0}', space=vmem, size = 0x10000, scoped, tag = 'input window, operand 3, single buffered']
    #allocation3 [shape = 's32[1]{0}', space=sflag, size = 0x4, scoped, tag = 'scoped memory for asl_landmark_forward.1']
    #allocation4 [shape = 's32[1]{0}', space=sflag, size = 0x4, scoped, tag = 'scoped memory for asl_landmark_forward.1']
    #allocation5 [shape = 'u8[4096]{0}', space=vmem, size = 0x1000, scoped, tag = 'output window, operand 0, single buffered']
    %12 = vsyncpa [#allocation3], 0
    %13 = vsyncpa [#allocation4], 0
    // Predicated region
    $region2: #{asl_landmark_forward.1} parent=1 // pred_check
      _
    $region3: #{asl_landmark_forward.1} parent=1 // pred_check_branch
      %15 = sbr.rel (0) target = $region5
    $region4: #{asl_landmark_forward.1} parent=1 // pred_region
      _
    $region5: #{asl_landmark_forward.1} parent=1 // pred_fallthru
      _
    // Predicated region
    $region6: #{asl_landmark_forward.1} parent=1 // pred_check
      _
    $region7: #{asl_landmark_forward.1} parent=1 // pred_check_branch
      %17 = sbr.rel (0) target = $region9
    $region8: #{asl_landmark_forward.1} parent=1 // pred_region
      _
    $region9: #{asl_landmark_forward.1} parent=1 // pred_fallthru
      _
    // Predicated region
    $region10: #{asl_landmark_forward.1} parent=1 // pred_check
      _
    $region11: #{asl_landmark_forward.1} parent=1 // pred_check_branch
      %19 = sbr.rel (0) target = $region13
    $region12: #{asl_landmark_forward.1} parent=1 // pred_region
      _
    $region13: #{asl_landmark_forward.1} parent=1 // pred_fallthru
      _
    // Predicated region
    $region14: #{asl_landmark_forward.1} parent=1 // pred_check
      _
    $region15: #{asl_landmark_forward.1} parent=1 // pred_check_branch
      %21 = sbr.rel (0) target = $region17
    $region16: #{asl_landmark_forward.1} parent=1 // pred_region
      %s23 = ssub.s32 2048, 2048
      %24 = vsyncadd [#allocation3], %s23
      %s25 = sshll.u32 [#allocation2], 4
      %s26 = int_to_ptr.vmem [resolvable:$true] %s25
      %31 = dma.hbm_to_vmem [thread:$0]  %s3, 2048, %s26, [#allocation3], 64, 64, 4
    $region17: #{asl_landmark_forward.1} parent=1 // pred_fallthru
      _
    // Predicated region
    $region18: #{asl_landmark_forward.1} parent=1 // pred_check
      _
    $region19: #{asl_landmark_forward.1} parent=1 // pred_check_branch
      %33 = sbr.rel (0) target = $region21
    $region20: #{asl_landmark_forward.1} parent=1 // pred_region
      _
    $region21: #{asl_landmark_forward.1} parent=1 // pred_fallthru
      _
    // Predicated region
    $region22: #{asl_landmark_forward.1} parent=1 // pred_check
      _
    $region23: #{asl_landmark_forward.1} parent=1 // pred_check_branch
      %35 = sbr.rel (0) target = $region25
    $region24: #{asl_landmark_forward.1} parent=1 // pred_region
      _
    $region25: #{asl_landmark_forward.1} parent=1 // pred_fallthru
      _
    // Predicated region
    $region26: #{asl_landmark_forward.1} parent=1 // pred_check
      _
    $region27: #{asl_landmark_forward.1} parent=1 // pred_check_branch
      %37 = sbr.rel (0) target = $region29
    $region28: #{asl_landmark_forward.1} parent=1 // pred_region
      _
    $region29: #{asl_landmark_forward.1} parent=1 // pred_fallthru
      _
    // Predicated region
    $region30: #{asl_landmark_forward.1} parent=1 // pred_check
      _
    $region31: #{asl_landmark_forward.1} parent=1 // pred_check_branch
      %39 = sbr.rel (0) target = $region33
    $region32: #{asl_landmark_forward.1} parent=1 // pred_region
      %40 = dma.done [#allocation3], 2048
    $region33: #{asl_landmark_forward.1} parent=1 // pred_fallthru
      _
    %v42 = vld [vmem:[%s0] sm:$0xff]
    %v43 = vpack.c.bf16 %v42, %v42
    %v44 = vld [vmem:[%s1] sm:$0xff]
    %v45 = vld [vmem:[%s1 + $0x8] sm:$0xff]
    %v46 = vld [vmem:[%s1 + $0x10] sm:$0xff]
    %v47 = vld [vmem:[%s1 + $0x18] sm:$0xff]
    %v48 = vld [vmem:[%s1 + $0x20] sm:$0xff]
    %v49 = vld [vmem:[%s1 + $0x28] sm:$0xff]
    %v50 = vld [vmem:[%s1 + $0x30] sm:$0xff]
    %v51 = vld [vmem:[%s1 + $0x38] sm:$0xff]
    %v52 = vld [vmem:[%s2] sm:$0x3]
    %v54 = vlaneseq
    %v55 = vshrl.u32 %v54, 7
    %v56 = vsub.s32 0, %v55
    %v57 = vrot.slane %v52, %v56
    %v58 = vlaneseq
    %v59 = vshrl.u32 %v58, 7
    %v60 = vsub.s32 1, %v59
    %v61 = vrot.slane %v52, %v60
    %v72 = vunpack.c.l.b16 %v44
    %v73 = vunpack.c.h.b16 %v44
    %v74 = vunpack.c.l.b16 %v45
    %v75 = vunpack.c.h.b16 %v45
    %v76 = vunpack.c.l.b16 %v46
    %v77 = vunpack.c.h.b16 %v46
    %v78 = vunpack.c.l.b16 %v47
    %v79 = vunpack.c.h.b16 %v47
    %v80 = vunpack.c.l.b16 %v48
    %v81 = vunpack.c.h.b16 %v48
    %v82 = vunpack.c.l.b16 %v49
    %v83 = vunpack.c.h.b16 %v49
    %v84 = vunpack.c.l.b16 %v50
    %v85 = vunpack.c.h.b16 %v50
    %v86 = vunpack.c.l.b16 %v51
    %v87 = vunpack.c.h.b16 %v51
    %v88 = vpack.c.b16 %v74, %v72
    %v89 = vpack.c.b16 %v75, %v73
    %v90 = vpack.c.b16 %v78, %v76
    %v91 = vpack.c.b16 %v79, %v77
    %v92 = vpack.c.b16 %v82, %v80
    %v93 = vpack.c.b16 %v83, %v81
    %v94 = vpack.c.b16 %v86, %v84
    %v95 = vpack.c.b16 %v87, %v85
    %vm102 = vcmask 515072
    %v104 = vsel %vm102, %v43, 0
    %vm106 = vcmask 1046528
    %vm107 = vcmask 1047552
    %v108 = vsel %vm106, 4294967295, 65535
    %v109 = vsel %vm107, %v108, 0
    %v111 = vand.u32 %v94, %v109
    %v114 = vand.u32 %v95, %v109
    %116 = vmatprep.subr.bf16.mxu0 0
    %117 = vmatpush1.bf16.msra.mxu0 0
    %118 = vmatprep.subr.bf16.mxu0 0
    %119 = vmatpush1.bf16.msra.mxu0 0
    %120 = vmatprep.subr.bf16.mxu0 0
    %121 = vmatpush1.bf16.msra.mxu0 0
    %122 = vmatprep.subr.bf16.mxu0 0
    %123 = vmatpush1.bf16.msra.mxu0 0
    %124 = vmatprep.subr.bf16.mxu0 %v114
    %125 = vmatpush1.bf16.msra.mxu0 %v111
    %126 = vmatprep.subr.bf16.mxu0 %v93
    %127 = vmatpush1.bf16.msra.mxu0 %v92
    %128 = vmatprep.subr.bf16.mxu0 %v91
    %129 = vmatpush1.bf16.msra.mxu0 %v90
    %130 = vmatprep.subr.bf16.mxu0 %v89
    %131 = vmatpush1.bf16.msra.mxu0 %v88
    %132 = vmatprep.subr.bf16.mxu0 0
    %133 = vmatpush2.bf16.msra.mxu0 0
    %134 = vmatprep.subr.bf16.mxu0 0
    %135 = vmatpush2.bf16.msra.mxu0 0
    %136 = vmatprep.subr.bf16.mxu0 0
    %137 = vmatpush2.bf16.msra.mxu0 0
    %138 = vmatprep.subr.bf16.mxu0 0
    %139 = vmatpush2.bf16.msra.mxu0 0
    %140 = vmatprep.subr.bf16.mxu0 0
    %141 = vmatpush2.bf16.msra.mxu0 0
    %142 = vmatprep.subr.bf16.mxu0 0
    %143 = vmatpush2.bf16.msra.mxu0 0
    %144 = vmatprep.subr.bf16.mxu0 0
    %145 = vmatpush2.bf16.msra.mxu0 0
    %146 = vmatprep.subr.bf16.mxu0 0
    %147 = vmatpush2.bf16.msra.mxu0 0
    %148 = vmatprep.mubr.bf16.mxu0 0
    %149 = vmatmul.mubr.bf16.gmra.mxu0 %v104
    %v150 = vpop.f32.mrf.mxu0
    %v151 = vadd.f32 %v57, %v150
    %v152 = vpop.f32.mrf.mxu0
    %v153 = vadd.f32 %v61, %v152
    %v154 = vpop.f32.mrf.mxu0
    %v155 = vpop.f32.mrf.mxu0
    %156 = vdwg.mxu0
    %v157 = vmax.f32 %v151, 0.0
    %v158 = vmax.f32 %v153, 0.0
    %v159 = vpack.c.bf16 %v157, %v157
    %v160 = vpack.c.bf16 %v158, %v158
    %v161 = vld [vmem:[#allocation2] sm:$0xf]
    %v162 = vld [vmem:[#allocation2 + $0x4] sm:$0xf]
    %v163 = vld [vmem:[#allocation2 + $0x8] sm:$0xf]
    %v164 = vld [vmem:[#allocation2 + $0xc] sm:$0xf]
    %v165 = vld [vmem:[#allocation2 + $0x10] sm:$0xf]
    %v166 = vld [vmem:[#allocation2 + $0x14] sm:$0xf]
    %v167 = vld [vmem:[#allocation2 + $0x18] sm:$0xf]
    %v168 = vld [vmem:[#allocation2 + $0x1c] sm:$0xf]
    %v169 = vld [vmem:[#allocation2 + $0x20] sm:$0xf]
    %v170 = vld [vmem:[#allocation2 + $0x24] sm:$0xf]
    %v171 = vld [vmem:[#allocation2 + $0x28] sm:$0xf]
    %v172 = vld [vmem:[#allocation2 + $0x2c] sm:$0xf]
    %v173 = vld [vmem:[#allocation2 + $0x30] sm:$0xf]
    %v174 = vld [vmem:[#allocation2 + $0x34] sm:$0xf]
    %v175 = vld [vmem:[#allocation2 + $0x38] sm:$0xf]
    %v176 = vld [vmem:[#allocation2 + $0x3c] sm:$0xf]
    %v177 = vld [vmem:[#allocation2 + $0x40] sm:$0xf]
    %v178 = vld [vmem:[#allocation2 + $0x44] sm:$0xf]
    %v179 = vld [vmem:[#allocation2 + $0x48] sm:$0xf]
    %v180 = vld [vmem:[#allocation2 + $0x4c] sm:$0xf]
    %v181 = vld [vmem:[#allocation2 + $0x50] sm:$0xf]
    %v182 = vld [vmem:[#allocation2 + $0x54] sm:$0xf]
    %v183 = vld [vmem:[#allocation2 + $0x58] sm:$0xf]
    %v184 = vld [vmem:[#allocation2 + $0x5c] sm:$0xf]
    %v185 = vld [vmem:[#allocation2 + $0x60] sm:$0xf]
    %v186 = vld [vmem:[#allocation2 + $0x64] sm:$0xf]
    %v187 = vld [vmem:[#allocation2 + $0x68] sm:$0xf]
    %v188 = vld [vmem:[#allocation2 + $0x6c] sm:$0xf]
    %v189 = vld [vmem:[#allocation2 + $0x70] sm:$0xf]
    %v190 = vld [vmem:[#allocation2 + $0x74] sm:$0xf]
    %v191 = vld [vmem:[#allocation2 + $0x78] sm:$0xf]
    %v192 = vld [vmem:[#allocation2 + $0x7c] sm:$0xf]
    %v193 = vld [vmem:[%s4] sm:$0x1]
    %v195 = vlaneseq
    %v196 = vshrl.u32 %v195, 7
    %v197 = vsub.s32 0, %v196
    %v198 = vrot.slane %v193, %v197
    %v232 = vunpack.c.l.b16 %v161
    %v233 = vunpack.c.l.b16 %v162
    %v234 = vunpack.c.l.b16 %v163
    %v235 = vunpack.c.l.b16 %v164
    %v236 = vunpack.c.l.b16 %v165
    %v237 = vunpack.c.l.b16 %v166
    %v238 = vunpack.c.l.b16 %v167
    %v239 = vunpack.c.l.b16 %v168
    %v240 = vunpack.c.l.b16 %v169
    %v241 = vunpack.c.l.b16 %v170
    %v242 = vunpack.c.l.b16 %v171
    %v243 = vunpack.c.l.b16 %v172
    %v244 = vunpack.c.l.b16 %v173
    %v245 = vunpack.c.l.b16 %v174
    %v246 = vunpack.c.l.b16 %v175
    %v247 = vunpack.c.l.b16 %v176
    %v248 = vunpack.c.l.b16 %v177
    %v249 = vunpack.c.l.b16 %v178
    %v250 = vunpack.c.l.b16 %v179
    %v251 = vunpack.c.l.b16 %v180
    %v252 = vunpack.c.l.b16 %v181
    %v253 = vunpack.c.l.b16 %v182
    %v254 = vunpack.c.l.b16 %v183
    %v255 = vunpack.c.l.b16 %v184
    %v256 = vunpack.c.l.b16 %v185
    %v257 = vunpack.c.l.b16 %v186
    %v258 = vunpack.c.l.b16 %v187
    %v259 = vunpack.c.l.b16 %v188
    %v260 = vunpack.c.l.b16 %v189
    %v261 = vunpack.c.l.b16 %v190
    %v262 = vunpack.c.l.b16 %v191
    %v263 = vunpack.c.l.b16 %v192
    %v264 = vpack.c.b16 %v233, %v232
    %v265 = vpack.c.b16 %v235, %v234
    %v266 = vpack.c.b16 %v237, %v236
    %v267 = vpack.c.b16 %v239, %v238
    %v268 = vpack.c.b16 %v241, %v240
    %v269 = vpack.c.b16 %v243, %v242
    %v270 = vpack.c.b16 %v245, %v244
    %v271 = vpack.c.b16 %v247, %v246
    %v272 = vpack.c.b16 %v249, %v248
    %v273 = vpack.c.b16 %v251, %v250
    %v274 = vpack.c.b16 %v253, %v252
    %v275 = vpack.c.b16 %v255, %v254
    %v276 = vpack.c.b16 %v257, %v256
    %v277 = vpack.c.b16 %v259, %v258
    %v278 = vpack.c.b16 %v261, %v260
    %v279 = vpack.c.b16 %v263, %v262
    %296 = vmatprep.subr.bf16.mxu0 0
    %297 = vmatpush1.bf16.msra.mxu0 %v271
    %298 = vmatprep.subr.bf16.mxu0 0
    %299 = vmatpush1.bf16.msra.mxu0 %v270
    %300 = vmatprep.subr.bf16.mxu0 0
    %301 = vmatpush1.bf16.msra.mxu0 %v269
    %302 = vmatprep.subr.bf16.mxu0 0
    %303 = vmatpush1.bf16.msra.mxu0 %v268
    %304 = vmatprep.subr.bf16.mxu0 0
    %305 = vmatpush1.bf16.msra.mxu0 %v267
    %306 = vmatprep.subr.bf16.mxu0 0
    %307 = vmatpush1.bf16.msra.mxu0 %v266
    %308 = vmatprep.subr.bf16.mxu0 0
    %309 = vmatpush1.bf16.msra.mxu0 %v265
    %310 = vmatprep.subr.bf16.mxu0 0
    %311 = vmatpush1.bf16.msra.mxu0 %v264
    %312 = vmatprep.subr.bf16.mxu0 0
    %313 = vmatpush2.bf16.msra.mxu0 %v279
    %314 = vmatprep.subr.bf16.mxu0 0
    %315 = vmatpush2.bf16.msra.mxu0 %v278
    %316 = vmatprep.subr.bf16.mxu0 0
    %317 = vmatpush2.bf16.msra.mxu0 %v277
    %318 = vmatprep.subr.bf16.mxu0 0
    %319 = vmatpush2.bf16.msra.mxu0 %v276
    %320 = vmatprep.subr.bf16.mxu0 0
    %321 = vmatpush2.bf16.msra.mxu0 %v275
    %322 = vmatprep.subr.bf16.mxu0 0
    %323 = vmatpush2.bf16.msra.mxu0 %v274
    %324 = vmatprep.subr.bf16.mxu0 0
    %325 = vmatpush2.bf16.msra.mxu0 %v273
    %326 = vmatprep.subr.bf16.mxu0 0
    %327 = vmatpush2.bf16.msra.mxu0 %v272
    %328 = vmatprep.mubr.bf16.mxu0 %v160
    %329 = vmatmul.mubr.bf16.gmra.mxu0 %v159
    %v330 = vpop.f32.mrf.mxu0
    %v331 = vadd.f32 %v198, %v330
    %v332 = vpop.f32.mrf.mxu0
    %v333 = vpop.f32.mrf.mxu0
    %v334 = vpop.f32.mrf.mxu0
    %335 = vdwg.mxu0
    %v336 = vmax.f32 %v331, 0.0
    %v337 = vpack.c.bf16 %v336, %v336
    %v338 = vld [vmem:[%s5] sm:$0xf]
    %v339 = vld [vmem:[%s5 + $0x4] sm:$0xf]
    %v340 = vld [vmem:[%s5 + $0x8] sm:$0xf]
    %v341 = vld [vmem:[%s5 + $0xc] sm:$0xf]
    %v342 = vld [vmem:[%s5 + $0x10] sm:$0xf]
    %v343 = vld [vmem:[%s5 + $0x14] sm:$0xf]
    %v344 = vld [vmem:[%s5 + $0x18] sm:$0xf]
    %v345 = vld [vmem:[%s5 + $0x1c] sm:$0xf]
    %v346 = vld [vmem:[%s5 + $0x20] sm:$0xf]
    %v347 = vld [vmem:[%s5 + $0x24] sm:$0xf]
    %v348 = vld [vmem:[%s5 + $0x28] sm:$0xf]
    %v349 = vld [vmem:[%s5 + $0x2c] sm:$0xf]
    %v350 = vld [vmem:[%s5 + $0x30] sm:$0xf]
    %v351 = vld [vmem:[%s5 + $0x34] sm:$0xf]
    %v352 = vld [vmem:[%s5 + $0x38] sm:$0xf]
    %v353 = vld [vmem:[%s5 + $0x3c] sm:$0xf]
    %v354 = vld [vmem:[%s6] sm:$0x1]
    %v356 = vlaneseq
    %v357 = vshrl.u32 %v356, 7
    %v358 = vsub.s32 0, %v357
    %v359 = vrot.slane %v354, %v358
    %v377 = vunpack.c.l.b16 %v338
    %v378 = vunpack.c.l.b16 %v339
    %v379 = vunpack.c.l.b16 %v340
    %v380 = vunpack.c.l.b16 %v341
    %v381 = vunpack.c.l.b16 %v342
    %v382 = vunpack.c.l.b16 %v343
    %v383 = vunpack.c.l.b16 %v344
    %v384 = vunpack.c.l.b16 %v345
    %v385 = vunpack.c.l.b16 %v346
    %v386 = vunpack.c.l.b16 %v347
    %v387 = vunpack.c.l.b16 %v348
    %v388 = vunpack.c.l.b16 %v349
    %v389 = vunpack.c.l.b16 %v350
    %v390 = vunpack.c.l.b16 %v351
    %v391 = vunpack.c.l.b16 %v352
    %v392 = vunpack.c.l.b16 %v353
    %v393 = vpack.c.b16 %v378, %v377
    %v394 = vpack.c.b16 %v380, %v379
    %v395 = vpack.c.b16 %v382, %v381
    %v396 = vpack.c.b16 %v384, %v383
    %v397 = vpack.c.b16 %v386, %v385
    %v398 = vpack.c.b16 %v388, %v387
    %v399 = vpack.c.b16 %v390, %v389
    %v400 = vpack.c.b16 %v392, %v391
    %409 = vmatprep.subr.bf16.mxu0 0
    %410 = vmatpush1.bf16.msra.mxu0 %v400
    %411 = vmatprep.subr.bf16.mxu0 0
    %412 = vmatpush1.bf16.msra.mxu0 %v399
    %413 = vmatprep.subr.bf16.mxu0 0
    %414 = vmatpush1.bf16.msra.mxu0 %v398
    %415 = vmatprep.subr.bf16.mxu0 0
    %416 = vmatpush1.bf16.msra.mxu0 %v397
    %417 = vmatprep.subr.bf16.mxu0 0
    %418 = vmatpush1.bf16.msra.mxu0 %v396
    %419 = vmatprep.subr.bf16.mxu0 0
    %420 = vmatpush1.bf16.msra.mxu0 %v395
    %421 = vmatprep.subr.bf16.mxu0 0
    %422 = vmatpush1.bf16.msra.mxu0 %v394
    %423 = vmatprep.subr.bf16.mxu0 0
    %424 = vmatpush1.bf16.msra.mxu0 %v393
    %425 = vmatprep.subr.bf16.mxu0 0
    %426 = vmatpush2.bf16.msra.mxu0 0
    %427 = vmatprep.subr.bf16.mxu0 0
    %428 = vmatpush2.bf16.msra.mxu0 0
    %429 = vmatprep.subr.bf16.mxu0 0
    %430 = vmatpush2.bf16.msra.mxu0 0
    %431 = vmatprep.subr.bf16.mxu0 0
    %432 = vmatpush2.bf16.msra.mxu0 0
    %433 = vmatprep.subr.bf16.mxu0 0
    %434 = vmatpush2.bf16.msra.mxu0 0
    %435 = vmatprep.subr.bf16.mxu0 0
    %436 = vmatpush2.bf16.msra.mxu0 0
    %437 = vmatprep.subr.bf16.mxu0 0
    %438 = vmatpush2.bf16.msra.mxu0 0
    %439 = vmatprep.subr.bf16.mxu0 0
    %440 = vmatpush2.bf16.msra.mxu0 0
    %441 = vmatprep.mubr.bf16.mxu0 0
    %442 = vmatmul.mubr.bf16.gmra.mxu0 %v337
    %v443 = vpop.f32.mrf.mxu0
    %v444 = vadd.f32 %v359, %v443
    %v445 = vpop.f32.mrf.mxu0
    %v446 = vpop.f32.mrf.mxu0
    %v447 = vpop.f32.mrf.mxu0
    %448 = vdwg.mxu0
    %vm449 = vcmask 211968
    %450 = vst.msk [vmem:[#allocation5] sm:$0xff] %vm449, %v444
    // Predicated region
    $region34: #{asl_landmark_forward.1} parent=1 // pred_check
      _
    $region35: #{asl_landmark_forward.1} parent=1 // pred_check_branch
      %452 = sbr.rel (0) target = $region37
    $region36: #{asl_landmark_forward.1} parent=1 // pred_region
      %s454 = ssub.s32 128, 128
      %455 = vsyncadd [#allocation4], %s454
      %s457 = sshll.u32 [#allocation5], 4
      %s458 = int_to_ptr.vmem [resolvable:$true] %s457
      %460 = dma.vmem_to_hbm [thread:$0]  %s458, 128, %s7, [#allocation4]
    $region37: #{asl_landmark_forward.1} parent=1 // pred_fallthru
      _
    // Predicated region
    $region38: #{asl_landmark_forward.1} parent=1 // pred_check
      _
    $region39: #{asl_landmark_forward.1} parent=1 // pred_check_branch
      %462 = sbr.rel (0) target = $region41
    $region40: #{asl_landmark_forward.1} parent=1 // pred_region
      %463 = dma.done [#allocation4], 128
    $region41: #{asl_landmark_forward.1} parent=1 // pred_fallthru
      _
    %464 = vsyncpa [#allocation3], 1
    %465 = vsyncpa [#allocation4], 1

</llo_original>
